<compile_context>
chip_gen: v5e
topology: v5e:2x2
jax: 0.10.0
libtpu: 0.0.40
codegen_flags: <defaults>
</compile_context>

<pallas_src>
import functools
import numpy as np

import jax
import jax.numpy as jnp
from jax.experimental import pallas as pl
from jax.experimental.pallas import tpu as pltpu


# ---------------------------------------------------------------------------
# Pallas kernel
# ---------------------------------------------------------------------------
def cycle_block_kernel(groups, w_img, eps, chunk_slots,
                       x_ref, w_ref, b_ref, o_ref):
    """One block = `imgs` images; channels on sublanes, H*W per image on lanes.

    x_ref : (imgs, C, H*W)  original input (flattened spatial on lanes)
    w_ref : (Cout, S*C)     folded CycleFC + LN-affine + fc_1 weights (bf16/f32)
    b_ref : (Cout, 1)       fully folded bias (f32)
    o_ref : (imgs, Cout, H*W)
    """
    imgs, c_in, hw = x_ref.shape
    mm_dtype = w_ref.dtype                      # matmul operand dtype (bf16 fast path)

    # Original images in f32 (needed for LN stats and the residual).
    xs = [x_ref[b].astype(jnp.float32) for b in range(imgs)]

    # ---- LayerNorm over channels, fused one-pass stats (E[x], E[x^2]) ----
    inv_c = jnp.float32(1.0 / c_in)
    xhats = []
    for xb in xs:
        mean = jnp.sum(xb, axis=0, keepdims=True) * inv_c
        ex2 = jnp.sum(xb * xb, axis=0, keepdims=True) * inv_c
        var = ex2 - mean * mean                 # one fewer XLU reduction pass
        xhats.append((xb - mean) * jax.lax.rsqrt(var + eps))

    # ---- hoisted lane-position masks: ONE compare per distinct dw ----
    j_in_row = jax.lax.broadcasted_iota(jnp.int32, (c_in, hw), 1) % w_img
    dw_set = sorted({dw % w_img for _, dws in groups for dw in dws} - {0})
    mask_w = {d: j_in_row < (w_img - d) for d in dw_set}

    def lane_roll(v, shift):
        # circular roll along the flattened H*W (lane) axis, jnp.roll semantics
        shift = shift % hw
        if shift == 0:
            return v
        return pltpu.roll(v, shift, axis=1)

    def roll_h(v, dh):
        # out[:, i*W + j] = v[:, ((i+dh) % H)*W + j]  (exact: one lane roll,
        # because the lane axis of `v` is exactly one image's H*W)
        return lane_roll(v, (-dh) * w_img)

    def roll_w(v, dw):
        # out[:, i*W + j] = v[:, i*W + (j+dw) % W]
        d = dw % w_img
        if d == 0:
            return v
        main = lane_roll(v, -d)                 # correct where j + d <  W
        wrap = lane_roll(v, w_img - d)          # correct where j + d >= W
        return jnp.where(mask_w[d], main, wrap)

    # ---- rolled copies (grouped by dh), chunked-K MXU accumulation ----
    total_slots = sum(len(dws) for _, dws in groups)
    n_chunk = total_slots if chunk_slots is None else max(1, int(chunk_slots))

    def flush(pending, k0, acc):
        xc = pending[0] if len(pending) == 1 else jnp.concatenate(pending, axis=0)
        kc = xc.shape[0]
        d = jnp.dot(w_ref[:, k0:k0 + kc], xc, preferred_element_type=jnp.float32)
        return k0 + kc, (d if acc is None else acc + d)

    acc, pending, k0 = None, [], 0
    for dh, dws in groups:                      # static; unrolled at trace time
        xh = [roll_h(v, dh) for v in xhats]     # H-rolled tensors reused per group
        for dw in dws:
            rolled = [roll_w(v, dw).astype(mm_dtype) for v in xh]
            # merge images along lanes -> matmul N = imgs * H*W (lane-dense)
            pending.append(rolled[0] if imgs == 1
                           else jnp.concatenate(rolled, axis=1))
            if len(pending) >= n_chunk:
                k0, acc = flush(pending, k0, acc)
                pending = []
    if pending:
        k0, acc = flush(pending, k0, acc)

    out = acc + b_ref[...]                      # (Cout, imgs*HW), f32

    # ---- residual with the original (un-normalized) input, per image ----
    for b in range(imgs):
        o_ref[b] = (out[:, b * hw:(b + 1) * hw] + xs[b]).astype(o_ref.dtype)


# ---------------------------------------------------------------------------
# Parameter setup (deterministic, in-script)
# ---------------------------------------------------------------------------
def init_params(key, c):
    ks = jax.random.split(key, 10)
    return dict(
        W1=jax.random.normal(ks[0], (c, c), jnp.float32),
        W2=jax.random.normal(ks[1], (c, c), jnp.float32),
        W3=jax.random.normal(ks[2], (c, c), jnp.float32),
        b1=jax.random.normal(ks[3], (c,), jnp.float32),
        b2=jax.random.normal(ks[4], (c,), jnp.float32),
        b3=jax.random.normal(ks[5], (c,), jnp.float32),
        Wfc=jax.random.normal(ks[6], (c, c), jnp.float32) * 0.1,  # torch Linear (out, in)
        bfc=jax.random.normal(ks[7], (c,), jnp.float32) * 0.1,
        gamma=1.0 + 0.1 * jax.random.normal(ks[8], (c,), jnp.float32),
        beta=0.1 * jax.random.normal(ks[9], (c,), jnp.float32),
    )


def fold_params(params, c, mm_dtype=jnp.bfloat16):
    """One-time host-side folding (NOT in the forward path).

    Returns:
      groups : static tuple of (dh, (dw, ...)) distinct circular offsets,
               grouped by dh.
      w2d    : (Cout, S*C) concatenated folded weights in `mm_dtype`
               (W''_s = (diag(gamma) @ W_s @ Wfc.T)^T), ordered like `groups`.
      bias   : (Cout, 1) f32, (beta @ sum_s W_s + b1+b2+b3) @ Wfc.T + bfc
    """
    W1 = np.asarray(params["W1"], np.float64)
    W2 = np.asarray(params["W2"], np.float64)
    W3 = np.asarray(params["W3"], np.float64)
    b_cyc = np.asarray(params["b1"], np.float64) + np.asarray(
        params["b2"], np.float64) + np.asarray(params["b3"], np.float64)
    Wfc = np.asarray(params["Wfc"], np.float64)
    bfc = np.asarray(params["bfc"], np.float64)
    gamma = np.asarray(params["gamma"], np.float64)
    beta = np.asarray(params["beta"], np.float64)

    # Merge the 3 CycleFC weights per distinct (dh, dw) offset
    # (get_offset: dh = c % sh - 1, dw = (c // sh) % sw - 1).
    shift_map = {}
    for Wm, sh, sw in ((W1, 1, 7), (W2, 1, 1), (W3, 7, 1)):
        for ch in range(c):
            key = (ch % sh - 1, (ch // sh) % sw - 1)
            shift_map.setdefault(key, np.zeros((c, c)))[ch] += Wm[ch]

    groups = tuple(
        (dh, tuple(sorted(dw for (h, dw) in shift_map if h == dh)))
        for dh in sorted({k[0] for k in shift_map}))

    blocks = []
    w_sum = np.zeros((c, c))
    for dh, dws in groups:                  # MUST match the kernel's iteration order
        for dw in dws:
            Ws = shift_map[(dh, dw)]
            w_sum += Ws
            blocks.append(((gamma[:, None] * Ws) @ Wfc.T).T)   # (Cout, C)
    w2d = np.concatenate(blocks, axis=1)                        # (Cout, S*C)
    bias = (beta @ w_sum + b_cyc) @ Wfc.T + bfc                 # (Cout,)

    return (groups,
            jnp.asarray(w2d, mm_dtype),
            jnp.asarray(bias.reshape(c, 1), jnp.float32))


# ---------------------------------------------------------------------------
# Forward wrapper (pure JAX, jit-able; no transposes, no host work)
# ---------------------------------------------------------------------------
def cycle_block_forward(x_nchw, w2d, bias, *, groups, eps=1e-5,
                        imgs_per_block=None, chunk_slots=None):
    B, C, H, W = x_nchw.shape
    HW = H * W
    c_out = w2d.shape[0]
    assert c_out == C, "residual requires out_channels == in_channels"

    if imgs_per_block is None:
        # Default keeps >= 2 "parallel" grid steps when B >= 2 so both v7x
        # TensorCores get work.  Single-TC v5e/v6e prefer imgs_per_block=B
        # (one grid step, widest matmul N) -- pass it explicitly.
        imgs_per_block = max(1, B // 2)
    assert B % imgs_per_block == 0
    G = B // imgs_per_block
    S = sum(len(dws) for _, dws in groups)

    x3 = x_nchw.reshape(B, C, HW)           # free reshape, stays NCHW

    # Explicit VMEM budget: double-buffered I/O blocks + resident weights +
    # the rolled-copy slab (+ headroom), capped at v7x's 64 MiB physical VMEM.
    io_bytes = x_nchw.dtype.itemsize
    mm_bytes = w2d.dtype.itemsize
    block_elems = imgs_per_block * C * HW
    vmem_bytes = int(
        2 * 2 * block_elems * io_bytes                  # in + out, double-buffered
        + w2d.size * mm_bytes + bias.size * 4           # resident weights + bias
        + S * C * imgs_per_block * HW * mm_bytes        # rolled slab (less if chunked)
        + 3 * block_elems * 4                           # f32 x / xhat temporaries
        + (4 << 20))                                    # headroom
    vmem_bytes = max(8 << 20, min(vmem_bytes, 64 << 20))

    cost = pl.CostEstimate(
        flops=int(2 * B * c_out * S * C * HW + 12 * B * C * HW),
        transcendentals=int(B * HW),                    # rsqrt per spatial location
        bytes_accessed=int(2 * B * C * HW * io_bytes + w2d.size * mm_bytes))

    kern = functools.partial(cycle_block_kernel, groups, W, eps, chunk_slots)
    out = pl.pallas_call(
        kern,
        out_shape=jax.ShapeDtypeStruct((B, C, HW), x_nchw.dtype),
        grid=(G,),
        in_specs=[
            pl.BlockSpec((imgs_per_block, C, HW), lambda g: (g, 0, 0)),
            pl.BlockSpec(w2d.shape, lambda g: (0, 0)),
            pl.BlockSpec(bias.shape, lambda g: (0, 0)),
        ],
        out_specs=pl.BlockSpec((imgs_per_block, C, HW), lambda g: (g, 0, 0)),
        compiler_params=pltpu.CompilerParams(
            dimension_semantics=("parallel",),
            vmem_limit_bytes=vmem_bytes),
        cost_estimate=cost,
    )(x3, w2d, bias)

    return out.reshape(B, C, H, W)


# ---------------------------------------------------------------------------
# Pure-numpy reference (mirrors the PyTorch loops) for validation
# ---------------------------------------------------------------------------
def reference_forward(x_nchw, params):
    x = np.asarray(x_nchw, np.float64)
    B, C, H, W = x.shape
    gamma = np.asarray(params["gamma"], np.float64)
    beta = np.asarray(params["beta"], np.float64)

    xr = x.transpose(0, 2, 3, 1)                   # b h w c
    mean = xr.mean(-1, keepdims=True)
    var = ((xr - mean) ** 2).mean(-1, keepdims=True)
    xn = (xr - mean) / np.sqrt(var + 1e-5) * gamma + beta
    xn_nchw = xn.transpose(0, 3, 1, 2)

    def cyclefc(xin, Wm, b, sh, sw):
        Wm = np.asarray(Wm, np.float64)
        b = np.asarray(b, np.float64)
        out = np.zeros((B, C, H, W))
        for c in range(C):
            di = c % sh - 1
            dj = (c // sh) % sw - 1
            # xs[k, i, j] = xin[k, c, (i+di)%H, (j+dj)%W]
            xs = np.roll(xin[:, c], shift=(-di, -dj), axis=(1, 2))
            out += xs[:, None, :, :] * Wm[c, :][None, :, None, None]
        out += b[None, :, None, None]
        return out

    s = (cyclefc(xn_nchw, params["W1"], params["b1"], 1, 7)
         + cyclefc(xn_nchw, params["W2"], params["b2"], 1, 1)
         + cyclefc(xn_nchw, params["W3"], params["b3"], 7, 1))
    sr = s.transpose(0, 2, 3, 1)
    sr = sr @ np.asarray(params["Wfc"], np.float64).T + np.asarray(params["bfc"], np.float64)
    return sr.transpose(0, 3, 1, 2) + x


# ---------------------------------------------------------------------------
if __name__ == "__main__":
    key = jax.random.PRNGKey(0)
    k_x, k_p = jax.random.split(key)

    B, C, H, W = 2, 8, 16, 8                  # H*W = 128 -> one full lane tile
    x = jax.random.normal(k_x, (B, C, H, W), jnp.float32)
    params = init_params(k_p, C)
    ref = reference_forward(x, params)

    # --- exact-math check: f32 weights, default blocking (tight 1e-3) ---
    groups, w32, b32 = fold_params(params, C, mm_dtype=jnp.float32)
    out32 = jax.block_until_ready(
        jax.jit(functools.partial(cycle_block_forward, groups=groups))(x, w32, b32))
    np.testing.assert_allclose(np.asarray(out32), ref, rtol=1e-3, atol=1e-3)

    # --- exact-math check of the merged-lane + chunked-K code paths ---
    out32m = jax.block_until_ready(
        jax.jit(functools.partial(cycle_block_forward, groups=groups,
                                  imgs_per_block=B, chunk_slots=5))(x, w32, b32))
    np.testing.assert_allclose(np.asarray(out32m), ref, rtol=1e-3, atol=1e-3)

    # --- production fast path: bf16 MXU operands, f32 accumulate/LN/residual ---
    groups, wbf, bbf = fold_params(params, C, mm_dtype=jnp.bfloat16)

    # default blocking: 1 image / grid step (2 parallel steps -> v7x megacore)
    fwd = jax.jit(functools.partial(cycle_block_forward, groups=groups))
    out_bf = jax.block_until_ready(fwd(x, wbf, bbf))

    # merged blocking: both images on the lane axis (matmul N = B*H*W = 256,
    # single grid step) -- preferred on single-TC v5e/v6e and 256-wide MXUs
    fwd_m = jax.jit(functools.partial(cycle_block_forward, groups=groups,
                                      imgs_per_block=B))
    out_bfm = jax.block_until_ready(fwd_m(x, wbf, bbf))

    # bf16 operands quantize the folded weights/activations, so the check is
    # looser than the 1e-3 f32 check above (which already proves kernel math).
    np.testing.assert_allclose(np.asarray(out_bf), ref, rtol=5e-2, atol=5e-2)
    np.testing.assert_allclose(np.asarray(out_bfm), ref, rtol=5e-2, atol=5e-2)

    print("KERNEL_OK")
</pallas_src>

<mosaic_0001>
module attributes {stable_mosaic.version = 11 : i64} {
  func.func @cycle_block_kernel(%arg0: i32, %arg1: memref<1x8x128xf32, #tpu.memory_space<vmem>>, %arg2: memref<8x104xf32, #tpu.memory_space<vmem>>, %arg3: memref<8x1xf32, #tpu.memory_space<vmem>>, %arg4: memref<1x8x128xf32, #tpu.memory_space<vmem>>) attributes {dimension_semantics = [#tpu.dimension_semantics<parallel>], iteration_bounds = array<i64: 2>, scalar_prefetch = 0 : i64, scratch_operands = 0 : i64, tpu.core_type = #tpu.core_type<tc>, window_params = [{transform_indices = @transform_0, window_bounds = array<i64: 1, 8, 128>}, {pipeline_mode = #tpu.pipeline_mode<synchronous>, transform_indices = @transform_1, window_bounds = array<i64: 8, 104>}, {pipeline_mode = #tpu.pipeline_mode<synchronous>, transform_indices = @transform_2, window_bounds = array<i64: 8, 1>}, {transform_indices = @transform_3, window_bounds = array<i64: 1, 8, 128>}]} {
    %c0 = arith.constant 0 : index
    %c0_0 = arith.constant 0 : index
    %c0_1 = arith.constant 0 : index
    %0 = vector.load %arg1[%c0, %c0_0, %c0_1] : memref<1x8x128xf32, #tpu.memory_space<vmem>>, vector<1x8x128xf32>
    %1 = vector.shape_cast %0 : vector<1x8x128xf32> to vector<8x128xf32>
    %cst = arith.constant dense<0.000000e+00> : vector<128xf32>
    %2 = vector.multi_reduction <add>, %1, %cst [0] : vector<8x128xf32> to vector<128xf32>
    %3 = vector.shape_cast %2 : vector<128xf32> to vector<1x128xf32>
    %cst_2 = arith.constant 1.250000e-01 : f32
    %4 = vector.broadcast %cst_2 : f32 to vector<1x128xf32>
    %5 = arith.mulf %3, %4 : vector<1x128xf32>
    %6 = arith.mulf %1, %1 : vector<8x128xf32>
    %cst_3 = arith.constant dense<0.000000e+00> : vector<128xf32>
    %7 = vector.multi_reduction <add>, %6, %cst_3 [0] : vector<8x128xf32> to vector<128xf32>
    %8 = vector.shape_cast %7 : vector<128xf32> to vector<1x128xf32>
    %cst_4 = arith.constant 1.250000e-01 : f32
    %9 = vector.broadcast %cst_4 : f32 to vector<1x128xf32>
    %10 = arith.mulf %8, %9 : vector<1x128xf32>
    %11 = arith.mulf %5, %5 : vector<1x128xf32>
    %12 = arith.subf %10, %11 : vector<1x128xf32>
    %13 = vector.broadcast %5 : vector<1x128xf32> to vector<8x128xf32>
    %14 = arith.subf %1, %13 : vector<8x128xf32>
    %cst_5 = arith.constant 9.99999974E-6 : f32
    %15 = vector.broadcast %cst_5 : f32 to vector<1x128xf32>
    %16 = arith.addf %12, %15 : vector<1x128xf32>
    %17 = math.rsqrt %16 : vector<1x128xf32>
    %18 = vector.broadcast %17 : vector<1x128xf32> to vector<8x128xf32>
    %19 = arith.mulf %14, %18 : vector<8x128xf32>
    %20 = tpu.iota {dimensions = array<i32: 1>} : vector<8x128xi32>
    %c8_i32 = arith.constant 8 : i32
    %c0_i32 = arith.constant 0 : i32
    %21 = arith.cmpi eq, %c8_i32, %c0_i32 : i32
    %c1_i32 = arith.constant 1 : i32
    %22 = arith.select %21, %c1_i32, %c8_i32 : i32
    %23 = vector.broadcast %22 : i32 to vector<8x128xi32>
    %24 = arith.remsi %20, %23 : vector<8x128xi32>
    %c0_i32_6 = arith.constant 0 : i32
    %25 = vector.broadcast %c0_i32_6 : i32 to vector<8x128xi32>
    %26 = arith.cmpi ne, %24, %25 : vector<8x128xi32>
    %c0_i32_7 = arith.constant 0 : i32
    %27 = vector.broadcast %c0_i32_7 : i32 to vector<8x128xi32>
    %28 = arith.cmpi slt, %24, %27 : vector<8x128xi32>
    %c0_i32_8 = arith.constant 0 : i32
    %29 = arith.cmpi slt, %22, %c0_i32_8 : i32
    %30 = vector.broadcast %29 : i1 to vector<8x128xi1>
    %31 = vector.broadcast %30 : vector<8x128xi1> to vector<8x128xi1>
    %32 = arith.xori %28, %31 : vector<8x128xi1>
    %33 = arith.andi %32, %26 : vector<8x128xi1>
    %34 = vector.broadcast %22 : i32 to vector<8x128xi32>
    %35 = arith.addi %24, %34 : vector<8x128xi32>
    %36 = arith.select %33, %35, %24 : vector<8x128xi1>, vector<8x128xi32>
    %c7_i32 = arith.constant 7 : i32
    %37 = vector.broadcast %c7_i32 : i32 to vector<8x128xi32>
    %38 = arith.cmpi slt, %36, %37 : vector<8x128xi32>
    %c6_i32 = arith.constant 6 : i32
    %39 = vector.broadcast %c6_i32 : i32 to vector<8x128xi32>
    %40 = arith.cmpi slt, %36, %39 : vector<8x128xi32>
    %c5_i32 = arith.constant 5 : i32
    %41 = vector.broadcast %c5_i32 : i32 to vector<8x128xi32>
    %42 = arith.cmpi slt, %36, %41 : vector<8x128xi32>
    %c4_i32 = arith.constant 4 : i32
    %43 = vector.broadcast %c4_i32 : i32 to vector<8x128xi32>
    %44 = arith.cmpi slt, %36, %43 : vector<8x128xi32>
    %c3_i32 = arith.constant 3 : i32
    %45 = vector.broadcast %c3_i32 : i32 to vector<8x128xi32>
    %46 = arith.cmpi slt, %36, %45 : vector<8x128xi32>
    %c1_i32_9 = arith.constant 1 : i32
    %47 = vector.broadcast %c1_i32_9 : i32 to vector<8x128xi32>
    %48 = arith.cmpi slt, %36, %47 : vector<8x128xi32>
    %c8_i32_10 = arith.constant 8 : i32
    %49 = tpu.dynamic_rotate %19 by %c8_i32_10 dim 1 : vector<8x128xf32>, i32 -> vector<8x128xf32>
    %c121_i32 = arith.constant 121 : i32
    %50 = tpu.dynamic_rotate %49 by %c121_i32 dim 1 : vector<8x128xf32>, i32 -> vector<8x128xf32>
    %c1_i32_11 = arith.constant 1 : i32
    %51 = tpu.dynamic_rotate %49 by %c1_i32_11 dim 1 : vector<8x128xf32>, i32 -> vector<8x128xf32>
    %52 = arith.select %48, %50, %51 : vector<8x128xi1>, vector<8x128xf32>
    %c127_i32 = arith.constant 127 : i32
    %53 = tpu.dynamic_rotate %49 by %c127_i32 dim 1 : vector<8x128xf32>, i32 -> vector<8x128xf32>
    %c7_i32_12 = arith.constant 7 : i32
    %54 = tpu.dynamic_rotate %49 by %c7_i32_12 dim 1 : vector<8x128xf32>, i32 -> vector<8x128xf32>
    %55 = arith.select %38, %53, %54 : vector<8x128xi1>, vector<8x128xf32>
    %c126_i32 = arith.constant 126 : i32
    %56 = tpu.dynamic_rotate %49 by %c126_i32 dim 1 : vector<8x128xf32>, i32 -> vector<8x128xf32>
    %c6_i32_13 = arith.constant 6 : i32
    %57 = tpu.dynamic_rotate %49 by %c6_i32_13 dim 1 : vector<8x128xf32>, i32 -> vector<8x128xf32>
    %58 = arith.select %40, %56, %57 : vector<8x128xi1>, vector<8x128xf32>
    %c125_i32 = arith.constant 125 : i32
    %59 = tpu.dynamic_rotate %49 by %c125_i32 dim 1 : vector<8x128xf32>, i32 -> vector<8x128xf32>
    %c5_i32_14 = arith.constant 5 : i32
    %60 = tpu.dynamic_rotate %49 by %c5_i32_14 dim 1 : vector<8x128xf32>, i32 -> vector<8x128xf32>
    %61 = arith.select %42, %59, %60 : vector<8x128xi1>, vector<8x128xf32>
    %c124_i32 = arith.constant 124 : i32
    %62 = tpu.dynamic_rotate %49 by %c124_i32 dim 1 : vector<8x128xf32>, i32 -> vector<8x128xf32>
    %c4_i32_15 = arith.constant 4 : i32
    %63 = tpu.dynamic_rotate %49 by %c4_i32_15 dim 1 : vector<8x128xf32>, i32 -> vector<8x128xf32>
    %64 = arith.select %44, %62, %63 : vector<8x128xi1>, vector<8x128xf32>
    %c123_i32 = arith.constant 123 : i32
    %65 = tpu.dynamic_rotate %49 by %c123_i32 dim 1 : vector<8x128xf32>, i32 -> vector<8x128xf32>
    %c3_i32_16 = arith.constant 3 : i32
    %66 = tpu.dynamic_rotate %49 by %c3_i32_16 dim 1 : vector<8x128xf32>, i32 -> vector<8x128xf32>
    %67 = arith.select %46, %65, %66 : vector<8x128xi1>, vector<8x128xf32>
    %c121_i32_17 = arith.constant 121 : i32
    %68 = tpu.dynamic_rotate %19 by %c121_i32_17 dim 1 : vector<8x128xf32>, i32 -> vector<8x128xf32>
    %c1_i32_18 = arith.constant 1 : i32
    %69 = tpu.dynamic_rotate %19 by %c1_i32_18 dim 1 : vector<8x128xf32>, i32 -> vector<8x128xf32>
    %70 = arith.select %48, %68, %69 : vector<8x128xi1>, vector<8x128xf32>
    %c120_i32 = arith.constant 120 : i32
    %71 = tpu.dynamic_rotate %19 by %c120_i32 dim 1 : vector<8x128xf32>, i32 -> vector<8x128xf32>
    %c121_i32_19 = arith.constant 121 : i32
    %72 = tpu.dynamic_rotate %71 by %c121_i32_19 dim 1 : vector<8x128xf32>, i32 -> vector<8x128xf32>
    %c1_i32_20 = arith.constant 1 : i32
    %73 = tpu.dynamic_rotate %71 by %c1_i32_20 dim 1 : vector<8x128xf32>, i32 -> vector<8x128xf32>
    %74 = arith.select %48, %72, %73 : vector<8x128xi1>, vector<8x128xf32>
    %c112_i32 = arith.constant 112 : i32
    %75 = tpu.dynamic_rotate %19 by %c112_i32 dim 1 : vector<8x128xf32>, i32 -> vector<8x128xf32>
    %c121_i32_21 = arith.constant 121 : i32
    %76 = tpu.dynamic_rotate %75 by %c121_i32_21 dim 1 : vector<8x128xf32>, i32 -> vector<8x128xf32>
    %c1_i32_22 = arith.constant 1 : i32
    %77 = tpu.dynamic_rotate %75 by %c1_i32_22 dim 1 : vector<8x128xf32>, i32 -> vector<8x128xf32>
    %78 = arith.select %48, %76, %77 : vector<8x128xi1>, vector<8x128xf32>
    %c104_i32 = arith.constant 104 : i32
    %79 = tpu.dynamic_rotate %19 by %c104_i32 dim 1 : vector<8x128xf32>, i32 -> vector<8x128xf32>
    %c121_i32_23 = arith.constant 121 : i32
    %80 = tpu.dynamic_rotate %79 by %c121_i32_23 dim 1 : vector<8x128xf32>, i32 -> vector<8x128xf32>
    %c1_i32_24 = arith.constant 1 : i32
    %81 = tpu.dynamic_rotate %79 by %c1_i32_24 dim 1 : vector<8x128xf32>, i32 -> vector<8x128xf32>
    %82 = arith.select %48, %80, %81 : vector<8x128xi1>, vector<8x128xf32>
    %c96_i32 = arith.constant 96 : i32
    %83 = tpu.dynamic_rotate %19 by %c96_i32 dim 1 : vector<8x128xf32>, i32 -> vector<8x128xf32>
    %c121_i32_25 = arith.constant 121 : i32
    %84 = tpu.dynamic_rotate %83 by %c121_i32_25 dim 1 : vector<8x128xf32>, i32 -> vector<8x128xf32>
    %c1_i32_26 = arith.constant 1 : i32
    %85 = tpu.dynamic_rotate %83 by %c1_i32_26 dim 1 : vector<8x128xf32>, i32 -> vector<8x128xf32>
    %86 = arith.select %48, %84, %85 : vector<8x128xi1>, vector<8x128xf32>
    %c88_i32 = arith.constant 88 : i32
    %87 = tpu.dynamic_rotate %19 by %c88_i32 dim 1 : vector<8x128xf32>, i32 -> vector<8x128xf32>
    %c121_i32_27 = arith.constant 121 : i32
    %88 = tpu.dynamic_rotate %87 by %c121_i32_27 dim 1 : vector<8x128xf32>, i32 -> vector<8x128xf32>
    %c1_i32_28 = arith.constant 1 : i32
    %89 = tpu.dynamic_rotate %87 by %c1_i32_28 dim 1 : vector<8x128xf32>, i32 -> vector<8x128xf32>
    %90 = arith.select %48, %88, %89 : vector<8x128xi1>, vector<8x128xf32>
    %91 = tpu.concatenate %52, %49, %55, %58, %61, %64, %67, %70, %74, %78, %82, %86, %90 in 0 : vector<8x128xf32>, vector<8x128xf32>, vector<8x128xf32>, vector<8x128xf32>, vector<8x128xf32>, vector<8x128xf32>, vector<8x128xf32>, vector<8x128xf32>, vector<8x128xf32>, vector<8x128xf32>, vector<8x128xf32>, vector<8x128xf32>, vector<8x128xf32> -> vector<104x128xf32>
    %c0_29 = arith.constant 0 : index
    %c0_30 = arith.constant 0 : index
    %92 = vector.load %arg2[%c0_29, %c0_30] : memref<8x104xf32, #tpu.memory_space<vmem>>, vector<8x104xf32>
    %cst_31 = arith.constant dense<0.000000e+00> : vector<8x128xf32>
    %93 = tpu.matmul %92, %91, %cst_31 {dimension_numbers = #tpu.dot_dimension_numbers<[1], [0], [0], [1], [0, 0, 1, 1], [], []>} : vector<8x104xf32>, vector<104x128xf32>, vector<8x128xf32> -> vector<8x128xf32>
    %c0_32 = arith.constant 0 : index
    %c0_33 = arith.constant 0 : index
    %94 = vector.load %arg3[%c0_32, %c0_33] : memref<8x1xf32, #tpu.memory_space<vmem>>, vector<8x1xf32>
    %95 = vector.broadcast %94 : vector<8x1xf32> to vector<8x128xf32>
    %96 = arith.addf %93, %95 : vector<8x128xf32>
    %97 = arith.addf %96, %1 : vector<8x128xf32>
    %c0_34 = arith.constant 0 : index
    %c0_35 = arith.constant 0 : index
    %c0_36 = arith.constant 0 : index
    %98 = vector.load %arg4[%c0_34, %c0_35, %c0_36] : memref<1x8x128xf32, #tpu.memory_space<vmem>>, vector<1x8x128xf32>
    %99 = vector.shape_cast %98 : vector<1x8x128xf32> to vector<8x128xf32>
    %100 = vector.shape_cast %97 : vector<8x128xf32> to vector<1x8x128xf32>
    tpu.vector_store %arg4[%c0_34, %c0_35, %c0_36], %100 {strides = array<i32>} : memref<1x8x128xf32, #tpu.memory_space<vmem>>, vector<1x8x128xf32>,
    return
  }
  func.func @transform_0(%arg0: i32) -> (i32, i32, i32) {
    %c0_i32 = arith.constant 0 : i32
    %c0_i32_0 = arith.constant 0 : i32
    %c0_i32_1 = arith.constant 0 : i32
    return %arg0, %c0_i32, %c0_i32_0 : i32, i32, i32
  }
  func.func @transform_1(%arg0: i32) -> (i32, i32) {
    %c0_i32 = arith.constant 0 : i32
    %c0_i32_0 = arith.constant 0 : i32
    %c0_i32_1 = arith.constant 0 : i32
    return %c0_i32, %c0_i32_0 : i32, i32
  }
  func.func @transform_2(%arg0: i32) -> (i32, i32) {
    %c0_i32 = arith.constant 0 : i32
    %c0_i32_0 = arith.constant 0 : i32
    %c0_i32_1 = arith.constant 0 : i32
    return %c0_i32, %c0_i32_0 : i32, i32
  }
  func.func @transform_3(%arg0: i32) -> (i32, i32, i32) {
    %c0_i32 = arith.constant 0 : i32
    %c0_i32_0 = arith.constant 0 : i32
    %c0_i32_1 = arith.constant 0 : i32
    return %arg0, %c0_i32, %c0_i32_0 : i32, i32, i32
  }
}

</mosaic_0001>

<llo_original>
// kernel: cycle_block_forward.1
$region0: #{cycle_block_forward.1}
  #allocation0 [shape = 'u32[]', space=smem, size = 0x4, offset = 0x4, fixed_abs, tag = 'smem constant byte address 0x4 - core index']
  #allocation1 [shape = 'u32[72,128]{1,0:T(1,128)}', space=vmem, size = 0x9000, scoped, tag = 'internal scratch']
  %s0 = inlined_call_operand.vmem [shape: f32[2,8,128], index: 0, kind: input, shape index: {}]
  %s1 = inlined_call_operand.vmem [shape: f32[8,104], index: 1, kind: input, shape index: {}]
  %s2 = inlined_call_operand.vmem [shape: f32[8,1], index: 2, kind: input, shape index: {}]
  %s3 = inlined_call_operand.vmem [shape: f32[2,8,128], index: 3, kind: output, shape index: {}]
  %s4 = sld [smem:[#allocation0]]
  $region45: #{cycle_block_forward.1} parent=0
    _
  %s6 = ssub.s32 1, %s4
  %s7 = scalar_select 0, %s6, %s4
  loop: start=0, step=1, limit=4
  $region2: #{cycle_block_forward.1} parent=0 // loop_pre_header
    _
  $region3: #{cycle_block_forward.1} parent=0 // loop_header
    %s9 = sphi 0, %s13
    %p10 = scmp.ge.s32.totalorder %s9, 4
    %s19 = sphi 0, %s21
    %s22 = sphi 0, %s19
    %s23 = sphi 0, %s22
    %s39 = sphi 0, %s23
    %s43 = sphi 0, %s43
    %s45 = sphi 0, %s43
    %s46 = sphi 0, %s45
    %s60 = sphi 0, %s46
    %s64 = sphi 0, %s64
    %s66 = sphi 0, %s64
    %s67 = sphi 0, %s66
    %s81 = sphi 0, %s67
    %s87 = sphi 0, %s89
    %s90 = sphi 0, %s87
    %s91 = sphi 0, %s90
    %s107 = sphi 0, %s91
  $region4: #{cycle_block_forward.1} parent=0 // loop_header_branch
    %12 = sbr.rel (%p10) target = $region8
  $region5: #{cycle_block_forward.1} parent=0 // loop_body
    %s14 = ssub.s32 %s9, 1
    %s15 = ssub.s32 %s9, 2
    %s16 = sadd.s32 %s9, 1
    %s17 = ssub.s32 %s9, %s16
    %p18 = scmp.eq.s32.totalorder %s17, 0
    %s20 = sadd.s32 %s19, 1
    %s21 = scalar_select %p18, %s19, %s20
    %p24 = pneg %p18
    %p25 = scmp.eq.s32.totalorder %s9, 1
    %p26 = por %p24, %p25
    %p27 = scmp.ne.s32.totalorder %s19, %s22
    %p28 = scmp.eq.s32.totalorder %s9, 0
    %p29 = por %p27, %p28
    %p30 = scmp.ne.s32.totalorder %s19, %s22
    %p31 = scmp.eq.s32.totalorder %s14, 1
    %p32 = por %p30, %p31
    %p33 = scmp.ne.s32.totalorder %s22, %s23
    %p34 = scmp.eq.s32.totalorder %s14, 0
    %p35 = por %p33, %p34
    %p36 = scmp.ne.s32.totalorder %s22, %s23
    %p37 = scmp.eq.s32.totalorder %s15, 1
    %p38 = por %p36, %p37
    %p40 = scmp.ne.s32.totalorder %s23, %s39
    %p41 = scmp.eq.s32.totalorder %s15, 0
    %p42 = por %p40, %p41
    %s44 = sadd.s32 %s43, 1
    %p47 = scmp.eq.s32.totalorder %s9, 1
    %p48 = scmp.ne.s32.totalorder %s43, %s45
    %p49 = scmp.eq.s32.totalorder %s9, 0
    %p50 = por %p48, %p49
    %p51 = scmp.ne.s32.totalorder %s43, %s45
    %p52 = scmp.eq.s32.totalorder %s14, 1
    %p53 = por %p51, %p52
    %p54 = scmp.ne.s32.totalorder %s45, %s46
    %p55 = scmp.eq.s32.totalorder %s14, 0
    %p56 = por %p54, %p55
    %p57 = scmp.ne.s32.totalorder %s45, %s46
    %p58 = scmp.eq.s32.totalorder %s15, 1
    %p59 = por %p57, %p58
    %p61 = scmp.ne.s32.totalorder %s46, %s60
    %p62 = scmp.eq.s32.totalorder %s15, 0
    %p63 = por %p61, %p62
    %s65 = sadd.s32 %s64, 1
    %p68 = scmp.eq.s32.totalorder %s9, 1
    %p69 = scmp.ne.s32.totalorder %s64, %s66
    %p70 = scmp.eq.s32.totalorder %s9, 0
    %p71 = por %p69, %p70
    %p72 = scmp.ne.s32.totalorder %s64, %s66
    %p73 = scmp.eq.s32.totalorder %s14, 1
    %p74 = por %p72, %p73
    %p75 = scmp.ne.s32.totalorder %s66, %s67
    %p76 = scmp.eq.s32.totalorder %s14, 0
    %p77 = por %p75, %p76
    %p78 = scmp.ne.s32.totalorder %s66, %s67
    %p79 = scmp.eq.s32.totalorder %s15, 1
    %p80 = por %p78, %p79
    %p82 = scmp.ne.s32.totalorder %s67, %s81
    %p83 = scmp.eq.s32.totalorder %s15, 0
    %p84 = por %p82, %p83
    %s85 = ssub.s32 %s9, %s16
    %p86 = scmp.eq.s32.totalorder %s85, 0
    %s88 = sadd.s32 %s87, 1
    %s89 = scalar_select %p86, %s87, %s88
    %p92 = pneg %p86
    %p93 = scmp.eq.s32.totalorder %s9, 1
    %p94 = por %p92, %p93
    %p95 = scmp.ne.s32.totalorder %s87, %s90
    %p96 = scmp.eq.s32.totalorder %s9, 0
    %p97 = por %p95, %p96
    %p98 = scmp.ne.s32.totalorder %s87, %s90
    %p99 = scmp.eq.s32.totalorder %s14, 1
    %p100 = por %p98, %p99
    %p101 = scmp.ne.s32.totalorder %s90, %s91
    %p102 = scmp.eq.s32.totalorder %s14, 0
    %p103 = por %p101, %p102
    %p104 = scmp.ne.s32.totalorder %s90, %s91
    %p105 = scmp.eq.s32.totalorder %s15, 1
    %p106 = por %p104, %p105
    %p108 = scmp.ne.s32.totalorder %s91, %s107
    %p109 = scmp.eq.s32.totalorder %s15, 0
    %p110 = por %p108, %p109
    %p111 = scmp.le.s32.totalorder 1, %s9
    %p112 = scmp.lt.s32.totalorder %s9, 3
    %p113 = pnand %p111, %p112
    %p114 = pneg %p113
    // Predicated region
    $region9: #{cycle_block_forward.1} parent=5 // pred_check
      _
    $region10: #{cycle_block_forward.1} parent=5 // pred_check_branch
      %116 = sbr.rel (%p113) target = $region12
    $region11: #{cycle_block_forward.1} parent=5 // pred_region
      %s117 = ssub.s32 %s9, 1
      // Predicated region
      $region13: #{cycle_block_forward.1} parent=11 // pred_check
        %p118 = pneg %p56
      $region14: #{cycle_block_forward.1} parent=11 // pred_check_branch
        %120 = sbr.rel (%p118) target = $region16
      $region15: #{cycle_block_forward.1} parent=11 // pred_region
        _
      $region16: #{cycle_block_forward.1} parent=11 // pred_fallthru
        _
      // Predicated region
      $region17: #{cycle_block_forward.1} parent=11 // pred_check
        %p121 = pneg %p77
      $region18: #{cycle_block_forward.1} parent=11 // pred_check_branch
        %123 = sbr.rel (%p121) target = $region20
      $region19: #{cycle_block_forward.1} parent=11 // pred_region
        _
      $region20: #{cycle_block_forward.1} parent=11 // pred_fallthru
        _
    $region12: #{cycle_block_forward.1} parent=5 // pred_fallthru
      _
    %p124 = scmp.lt.s32.totalorder %s9, 2
    // Predicated region
    $region21: #{cycle_block_forward.1} parent=5 // pred_check
      %p125 = pneg %p124
    $region22: #{cycle_block_forward.1} parent=5 // pred_check_branch
      %127 = sbr.rel (%p125) target = $region24
    $region23: #{cycle_block_forward.1} parent=5 // pred_region
      // Predicated region
      $region25: #{cycle_block_forward.1} parent=23 // pred_check
        %p128 = pneg %p29
      $region26: #{cycle_block_forward.1} parent=23 // pred_check_branch
        %130 = sbr.rel (%p128) target = $region28
      $region27: #{cycle_block_forward.1} parent=23 // pred_region
        %p131 = scmp.lt.s32.totalorder %s9, 1
        %s132 = scalar_select %p131, %s9, 1
        %s133 = smul.addr %s132, 8
        %s134 = scalar_lea.vmem %s0, %s133
      $region28: #{cycle_block_forward.1} parent=23 // pred_fallthru
        _
    $region24: #{cycle_block_forward.1} parent=5 // pred_fallthru
      _
    %p135 = scmp.le.s32.totalorder 1, %s9
    %p136 = scmp.lt.s32.totalorder %s9, 3
    %p137 = pnand %p135, %p136
    %p138 = pneg %p137
    // Predicated region
    $region29: #{cycle_block_forward.1} parent=5 // pred_check
      _
    $region30: #{cycle_block_forward.1} parent=5 // pred_check_branch
      %140 = sbr.rel (%p137) target = $region32
    $region31: #{cycle_block_forward.1} parent=5 // pred_region
      %s141 = ssub.s32 %s9, 1
      %p142 = scmp.lt.s32.totalorder %s14, 1
      %s143 = scalar_select %p142, %s14, 1
      %s144 = smul.addr %s143, 8
      %s145 = scalar_lea.vmem %s0, %s144
      %p146 = pneg %p35
      %p147 = pneg %p32
      %p148 = pneg %p56
      %p149 = pneg %p53
      %p150 = pneg %p77
      %p151 = pneg %p74
      %p152 = pneg %p103
      %p153 = pneg %p100
      %p154 = scmp.lt.s32.totalorder %s14, 1
      %s155 = scalar_select %p154, %s14, 1
      %s156 = smul.addr %s155, 8
      %s157 = scalar_lea.vmem %s3, %s156
      %p158 = scmp.lt.s32.totalorder %s14, 1
      %s159 = scalar_select %p158, %s14, 1
      %s160 = smul.addr %s159, 8
      %s161 = scalar_lea.vmem %s0, %s160
      %p162 = scmp.lt.s32.totalorder %s14, 1
      %s163 = scalar_select %p162, %s14, 1
      %s164 = smul.addr %s163, 8
      %s165 = scalar_lea.vmem %s3, %s164
      %v166 = vld [vmem:[%s161] sm:$0xff]
      %v167 = vrot.slane %v166, 4
      %v168 = vadd.f32 %v166, %v167
      %v169 = vrot.slane %v168, 2
      %v170 = vadd.f32 %v168, %v169
      %v171 = vrot.slane %v170, 1
      %v172 = vadd.f32 %v170, %v171
      %v173 = vmul.f32 %v172, 0.125
      %v174 = vmul.f32 %v166, %v166
      %v175 = vrot.slane %v174, 4
      %v176 = vadd.f32 %v174, %v175
      %v177 = vrot.slane %v176, 2
      %v178 = vadd.f32 %v176, %v177
      %v179 = vrot.slane %v178, 1
      %v180 = vadd.f32 %v178, %v179
      %v181 = vmul.f32 %v180, 0.125
      %v182 = vmul.f32 %v173, %v173
      %v183 = vsub.f32 %v181, %v182
      %v184 = vsub.f32 %v166, %v173
      %v185 = vadd.f32 %v183, 1e-05
      %v186 = vrsqrt.pop %v185
      %v187 = vmul.f32 %v186, %v185
      %v188 = vmul.f32 %v187, %v186
      %v189 = vmul.f32 0.5, %v188
      %v190 = vsub.f32 1.5, %v189
      %v191 = vmul.f32 %v186, %v190
      %vm192 = vweird.f32 %v185
      %vm193 = vweird.f32 %v186
      %vm194 = vmor %vm192, %vm193
      %v195 = vsel %vm194, %v186, %v191
      %v196 = vmul.f32 %v184, %v195
      %v197 = vlaneseq
      %v198 = vand.u32 %v197, 127
      %vm199 = vcmp.lt.s32.totalorder %v198, 0
      %v200 = vsub.s32 0, %v198
      %v201 = vsel %vm199, %v200, %v198
      %v202 = vshrl.u32 %v201, 3
      %v203 = vand.u32 %v201, 7
      %v204 = vsub.s32 0, %v203
      %v205 = vsel %vm199, %v204, %v203
      %vm206 = vcmp.ne.s32.totalorder %v205, 0
      %vm207 = vcmp.lt.s32.totalorder %v205, 0
      %vm208 = vmand %vm207, %vm206
      %v209 = vadd.s32 %v205, 8
      %v210 = vsel %vm208, %v209, %v205
      %vm211 = vcmp.lt.s32.totalorder %v210, 7
      %vm212 = vcmp.lt.s32.totalorder %v210, 6
      %vm213 = vcmp.lt.s32.totalorder %v210, 5
      %vm214 = vcmp.lt.s32.totalorder %v210, 4
      %vm215 = vcmp.lt.s32.totalorder %v210, 3
      %vm216 = vcmp.lt.s32.totalorder %v210, 1
      %217 = vrot.lane.b32.xlu0 %v196, 8
      %v218 = vpop.permute.xlu0 %217
      %219 = vrot.lane.b32.xlu0 %v218, 121
      %v220 = vpop.permute.xlu0 %219
      %221 = vrot.lane.b32.xlu0 %v218, 1
      %v222 = vpop.permute.xlu0 %221
      %v223 = vsel %vm216, %v220, %v222
      %224 = vrot.lane.b32.xlu0 %v218, 127
      %v225 = vpop.permute.xlu0 %224
      %226 = vrot.lane.b32.xlu0 %v218, 7
      %v227 = vpop.permute.xlu0 %226
      %v228 = vsel %vm211, %v225, %v227
      %229 = vrot.lane.b32.xlu0 %v218, 126
      %v230 = vpop.permute.xlu0 %229
      %231 = vrot.lane.b32.xlu0 %v218, 6
      %v232 = vpop.permute.xlu0 %231
      %v233 = vsel %vm212, %v230, %v232
      %234 = vrot.lane.b32.xlu0 %v218, 125
      %v235 = vpop.permute.xlu0 %234
      %236 = vrot.lane.b32.xlu0 %v218, 5
      %v237 = vpop.permute.xlu0 %236
      %v238 = vsel %vm213, %v235, %v237
      %239 = vrot.lane.b32.xlu0 %v218, 124
      %v240 = vpop.permute.xlu0 %239
      %241 = vrot.lane.b32.xlu0 %v218, 4
      %v242 = vpop.permute.xlu0 %241
      %v243 = vsel %vm214, %v240, %v242
      %244 = vrot.lane.b32.xlu0 %v218, 123
      %v245 = vpop.permute.xlu0 %244
      %246 = vrot.lane.b32.xlu0 %v218, 3
      %v247 = vpop.permute.xlu0 %246
      %v248 = vsel %vm215, %v245, %v247
      %249 = vrot.lane.b32.xlu0 %v196, 121
      %v250 = vpop.permute.xlu0 %249
      %251 = vrot.lane.b32.xlu0 %v196, 1
      %v252 = vpop.permute.xlu0 %251
      %v253 = vsel %vm216, %v250, %v252
      %254 = vrot.lane.b32.xlu0 %v196, 120
      %v255 = vpop.permute.xlu0 %254
      %256 = vrot.lane.b32.xlu0 %v255, 121
      %v257 = vpop.permute.xlu0 %256
      %258 = vrot.lane.b32.xlu0 %v255, 1
      %v259 = vpop.permute.xlu0 %258
      %v260 = vsel %vm216, %v257, %v259
      %261 = vrot.lane.b32.xlu0 %v196, 112
      %v262 = vpop.permute.xlu0 %261
      %263 = vrot.lane.b32.xlu0 %v262, 121
      %v264 = vpop.permute.xlu0 %263
      %265 = vrot.lane.b32.xlu0 %v262, 1
      %v266 = vpop.permute.xlu0 %265
      %v267 = vsel %vm216, %v264, %v266
      %268 = vrot.lane.b32.xlu0 %v196, 104
      %v269 = vpop.permute.xlu0 %268
      %270 = vrot.lane.b32.xlu0 %v269, 121
      %v271 = vpop.permute.xlu0 %270
      %272 = vrot.lane.b32.xlu0 %v269, 1
      %v273 = vpop.permute.xlu0 %272
      %v274 = vsel %vm216, %v271, %v273
      %275 = vrot.lane.b32.xlu0 %v196, 96
      %v276 = vpop.permute.xlu0 %275
      %277 = vrot.lane.b32.xlu0 %v276, 121
      %v278 = vpop.permute.xlu0 %277
      %279 = vrot.lane.b32.xlu0 %v276, 1
      %v280 = vpop.permute.xlu0 %279
      %v281 = vsel %vm216, %v278, %v280
      %282 = vrot.lane.b32.xlu0 %v196, 88
      %v283 = vpop.permute.xlu0 %282
      %284 = vrot.lane.b32.xlu0 %v283, 121
      %v285 = vpop.permute.xlu0 %284
      %286 = vrot.lane.b32.xlu0 %v283, 1
      %v287 = vpop.permute.xlu0 %286
      %v288 = vsel %vm216, %v285, %v287
      %v289 = vld [vmem:[%s1] sm:$0xff]
      %v290 = vld [vmem:[%s2] sm:$0xff]
      %292 = vset.pattern.permute.xlu0 0
      %293 = vperm.xlu0 %292, %v290
      %v294 = vpop.permute.xlu0 %293
      %vm296 = vcmask 850944
      %v298 = vsel %vm296, %v289, 0
      %300 = vmatpush.msra.mxu0 0.0
      %301 = vmatpush.msra.mxu0 0.0
      %302 = vmatpush.msra.mxu0 0.0
      %303 = vmatpush.msra.mxu0 %v288
      %304 = vmatpush.msra.mxu0 %v281
      %305 = vmatpush.msra.mxu0 %v274
      %306 = vmatpush.msra.mxu0 %v267
      %307 = vmatpush.msra.mxu0 %v260
      %308 = vmatpush.msra.mxu0 %v253
      %309 = vmatpush.msra.mxu0 %v248
      %310 = vmatpush.msra.mxu0 %v243
      %311 = vmatpush.msra.mxu0 %v238
      %312 = vmatpush.msra.mxu0 %v233
      %313 = vmatpush.msra.mxu0 %v228
      %314 = vmatpush.msra.mxu0 %v218
      %315 = vmatpush.msra.mxu0 %v223
      %316 = vmatmul.f32.gmra.mxu0 %v298
      %v317 = vpop.f32.mrf.mxu0
      %v318 = vadd.f32 %v294, %v317
      %319 = vdwg.mxu0
      %v320 = vadd.f32 %v318, %v166
      %321 = vst [vmem:[%s165] sm:$0xff] %v320
      %p322 = scmp.lt.s32.totalorder %s14, 1
      %s323 = scalar_select %p322, %s14, 1
      %s324 = smul.addr %s323, 8
      %s325 = scalar_lea.vmem %s3, %s324
      // Predicated region
      $region33: #{cycle_block_forward.1} parent=31 // pred_check
        %p326 = pneg %p100
      $region34: #{cycle_block_forward.1} parent=31 // pred_check_branch
        %328 = sbr.rel (%p326) target = $region36
      $region35: #{cycle_block_forward.1} parent=31 // pred_region
        _
      $region36: #{cycle_block_forward.1} parent=31 // pred_fallthru
        _
    $region32: #{cycle_block_forward.1} parent=5 // pred_fallthru
      _
    %p329 = scmp.le.s32.totalorder 2, %s9
    // Predicated region
    $region37: #{cycle_block_forward.1} parent=5 // pred_check
      %p330 = pneg %p329
    $region38: #{cycle_block_forward.1} parent=5 // pred_check_branch
      %332 = sbr.rel (%p330) target = $region40
    $region39: #{cycle_block_forward.1} parent=5 // pred_region
      %s333 = ssub.s32 %s9, 2
      // Predicated region
      $region41: #{cycle_block_forward.1} parent=39 // pred_check
        %p334 = pneg %p106
      $region42: #{cycle_block_forward.1} parent=39 // pred_check_branch
        %336 = sbr.rel (%p334) target = $region44
      $region43: #{cycle_block_forward.1} parent=39 // pred_region
        %p337 = scmp.lt.s32.totalorder %s15, 1
        %s338 = scalar_select %p337, %s15, 1
        %s339 = smul.addr %s338, 8
        %s340 = scalar_lea.vmem %s3, %s339
      $region44: #{cycle_block_forward.1} parent=39 // pred_fallthru
        _
    $region40: #{cycle_block_forward.1} parent=5 // pred_fallthru
      _
  $region6: #{cycle_block_forward.1} parent=0 // loop_footer
    %s13 = sadd.s32 1, %s9
  $region7: #{cycle_block_forward.1} parent=0 // loop_footer_branch
    %8 = sbr.rel target = $region3
  $region8: #{cycle_block_forward.1} parent=0 // loop_exit
    _

</llo_original>
